<compile_context>
chip_gen: v6e
topology: v6e:2x2x1
jax: 0.10.0
libtpu: 0.0.40
codegen_flags: <defaults>
</compile_context>

<pallas_src>
import functools

import jax
import jax.numpy as jnp
from jax.experimental import pallas as pl
from jax.experimental.pallas import tpu as pltpu


def _round_up(x: int, m: int) -> int:
    return ((x + m - 1) // m) * m


def _largest_tile(padded: int, max_tile: int, gran: int) -> int:
    """Largest multiple of `gran` that divides `padded` and is <= max_tile."""
    q = padded // gran
    limit = max(1, max_tile // gran)
    best = 1
    for d in range(1, limit + 1):
        if q % d == 0:
            best = d
    return best * gran


def linreg_kernel(x_ref, w_ref, b_ref, o_ref):
    """One (tm, tn) output tile; accumulates directly into o_ref over K."""

    @pl.when(pl.program_id(2) == 0)
    def _():
        # Initialize the resident f32 output tile with the (broadcast) bias.
        o_ref[...] = jnp.broadcast_to(
            b_ref[...].astype(jnp.float32), o_ref.shape
        )

    # bf16 x bf16 -> f32 on the MXU, accumulated into the resident output.
    o_ref[...] += jnp.dot(
        x_ref[...], w_ref[...], preferred_element_type=jnp.float32
    )


def prepare_params(w_t, b, compute_dtype=jnp.bfloat16):
    """Pad K/N to multiples of 128 and cast the weight once, at init time."""
    K, N = w_t.shape
    Kp = _round_up(K, 128)
    Np = _round_up(N, 128)
    w_p = jnp.pad(w_t, ((0, Kp - K), (0, Np - N))).astype(compute_dtype)
    b_p = jnp.pad(b.reshape(1, -1), ((0, 0), (0, Np - N))).astype(jnp.float32)
    return w_p, b_p


@functools.partial(
    jax.jit, static_argnames=("out_features", "tm_max", "tn_max", "tk_max")
)
def linreg_forward(x, w_p, b_p, *, out_features, tm_max=512, tn_max=512,
                   tk_max=512):
    """x: (B, K) f32, w_p: (Kp, Np) pre-padded compute dtype, b_p: (1, Np) f32.

    Returns (B, out_features) f32.
    """
    B, K = x.shape
    Kp, Np = w_p.shape
    assert K <= Kp and out_features <= Np

    compute_dtype = w_p.dtype
    itemsize = jnp.dtype(compute_dtype).itemsize
    sub_gran = 16 if itemsize < 4 else 8  # bf16 packs 16 rows per sublane tile

    # M tile plan: single tile for small/medium batch (weight-streaming,
    # GEMV-like), 256-row tiles for large batches.
    if B <= tm_max:
        tm = _round_up(B, sub_gran)
        Bp = tm
    else:
        tm = 256
        Bp = _round_up(B, tm)

    # N/K tiles: largest 128-multiples that divide the 128-padded extents.
    tn = _largest_tile(Np, tn_max, 128)
    tk = _largest_tile(Kp, tk_max, 128)

    # Cast x to the compute dtype and pad only if needed (weights are already
    # pre-padded/pre-cast at init, so this is the only per-call prep).
    x_c = x.astype(compute_dtype)
    pad_m, pad_k = Bp - B, Kp - K
    if pad_m or pad_k:
        x_c = jnp.pad(x_c, ((0, pad_m), (0, pad_k)))

    grid = (Bp // tm, Np // tn, Kp // tk)

    cost = pl.CostEstimate(
        flops=2 * Bp * Kp * Np,
        transcendentals=0,
        bytes_accessed=(
            grid[1] * Bp * Kp * itemsize      # x re-streamed per N tile
            + grid[0] * Kp * Np * itemsize    # W re-streamed per M tile
            + Np * 4                          # bias
            + Bp * Np * 4                     # output
        ),
    )

    out_p = pl.pallas_call(
        linreg_kernel,
        out_shape=jax.ShapeDtypeStruct((Bp, Np), jnp.float32),
        grid=grid,
        in_specs=[
            # x tile: indexed by (M, K) grid axes.
            pl.BlockSpec((tm, tk), lambda i, j, k: (i, k)),
            # W tile: indexed by (K, N) grid axes.
            pl.BlockSpec((tk, tn), lambda i, j, k: (k, j)),
            # bias tile: indexed only by the N grid axis.
            pl.BlockSpec((1, tn), lambda i, j, k: (0, j)),
        ],
        out_specs=pl.BlockSpec((tm, tn), lambda i, j, k: (i, j)),
        compiler_params=pltpu.CompilerParams(
            # M/N independent -> megacore-shardable (v7x); K reduction stays
            # sequential over the resident output tile.
            dimension_semantics=("parallel", "parallel", "arbitrary"),
        ),
        cost_estimate=cost,
    )(x_c, w_p, b_p)

    return out_p[:B, :out_features]


def init_linreg_params(key, in_size, out_size, dtype=jnp.float32):
    # Deterministic init mimicking nn.Linear: U(-1/sqrt(in), 1/sqrt(in)).
    kw, kb = jax.random.split(key)
    bound = 1.0 / (in_size ** 0.5)
    # PyTorch stores weight as (out, in); we keep the transposed (in, out).
    w_t = jax.random.uniform(kw, (in_size, out_size), dtype, -bound, bound)
    b = jax.random.uniform(kb, (1, out_size), dtype, -bound, bound)
    return w_t, b


if __name__ == "__main__":
    key = jax.random.PRNGKey(0)
    k_x, k_p = jax.random.split(key)

    # Small shapes consistent with the module.
    batch, in_size, out_size = 8, 32, 16
    x = jax.random.normal(k_x, (batch, in_size), jnp.float32)
    w_t, b = init_linreg_params(k_p, in_size, out_size)
    w_p, b_p = prepare_params(w_t, b)

    y = linreg_forward(x, w_p, b_p, out_features=out_size)
    jax.block_until_ready(y)
    assert y.shape == (batch, out_size)

    # Reference in the same precision regime (bf16 operands, f32 accumulate).
    x_bf = x.astype(jnp.bfloat16).astype(jnp.float32)
    w_bf = w_t.astype(jnp.bfloat16).astype(jnp.float32)
    ref_bf = x_bf @ w_bf + b
    assert jnp.allclose(y, ref_bf, atol=2e-3, rtol=2e-3)
    # And reasonably close to the full-f32 reference.
    assert jnp.allclose(y, x @ w_t + b, atol=5e-2, rtol=5e-2)

    # Larger, non-128-aligned shape exercising padding + the K reduction.
    k2x, k2p = jax.random.split(jax.random.PRNGKey(1))
    x2 = jax.random.normal(k2x, (384, 300), jnp.float32)
    w2, b2 = init_linreg_params(k2p, 300, 200)
    w2_p, b2_p = prepare_params(w2, b2)
    y2 = linreg_forward(x2, w2_p, b2_p, out_features=200)
    jax.block_until_ready(y2)
    ref2_bf = (x2.astype(jnp.bfloat16).astype(jnp.float32)
               @ w2.astype(jnp.bfloat16).astype(jnp.float32) + b2)
    assert y2.shape == (384, 200)
    assert jnp.allclose(y2, ref2_bf, atol=2e-3, rtol=2e-3)
    assert jnp.allclose(y2, x2 @ w2 + b2, atol=5e-2, rtol=5e-2)

    print("KERNEL_OK")
</pallas_src>

<mosaic_0001>
module attributes {stable_mosaic.version = 11 : i64} {
  func.func @linreg_kernel(%arg0: i32, %arg1: i32, %arg2: i32, %arg3: memref<16x128xbf16, #tpu.memory_space<vmem>>, %arg4: memref<128x128xbf16, #tpu.memory_space<vmem>>, %arg5: memref<1x128xf32, #tpu.memory_space<vmem>>, %arg6: memref<16x128xf32, #tpu.memory_space<vmem>>) attributes {dimension_semantics = [#tpu.dimension_semantics<parallel>, #tpu.dimension_semantics<parallel>, #tpu.dimension_semantics<arbitrary>], iteration_bounds = array<i64: 1, 1, 1>, scalar_prefetch = 0 : i64, scratch_operands = 0 : i64, tpu.core_type = #tpu.core_type<tc>, window_params = [{transform_indices = @transform_0, window_bounds = array<i64: 16, 128>}, {transform_indices = @transform_1, window_bounds = array<i64: 128, 128>}, {transform_indices = @transform_2, window_bounds = array<i64: 1, 128>}, {transform_indices = @transform_3, window_bounds = array<i64: 16, 128>}]} {
    %c0_i32 = arith.constant 0 : i32
    %0 = arith.cmpi eq, %arg2, %c0_i32 : i32
    %1 = arith.extui %0 : i1 to i32
    %c0_i32_0 = arith.constant 0 : i32
    %2 = arith.cmpi ne, %1, %c0_i32_0 : i32
    scf.if %2 {
      %c0_8 = arith.constant 0 : index
      %c0_9 = arith.constant 0 : index
      %9 = vector.load %arg5[%c0_8, %c0_9] : memref<1x128xf32, #tpu.memory_space<vmem>>, vector<1x128xf32>
      %10 = vector.shape_cast %9 : vector<1x128xf32> to vector<1x128xf32>
      %11 = vector.broadcast %10 : vector<1x128xf32> to vector<16x128xf32>
      %c0_10 = arith.constant 0 : index
      %c0_11 = arith.constant 0 : index
      %12 = vector.load %arg6[%c0_10, %c0_11] : memref<16x128xf32, #tpu.memory_space<vmem>>, vector<16x128xf32>
      tpu.vector_store %arg6[%c0_10, %c0_11], %11 {strides = array<i32>} : memref<16x128xf32, #tpu.memory_space<vmem>>, vector<16x128xf32>,
    } else {
    }
    %c0 = arith.constant 0 : index
    %c0_1 = arith.constant 0 : index
    %3 = vector.load %arg6[%c0, %c0_1] : memref<16x128xf32, #tpu.memory_space<vmem>>, vector<16x128xf32>
    %c0_2 = arith.constant 0 : index
    %c0_3 = arith.constant 0 : index
    %4 = vector.load %arg3[%c0_2, %c0_3] : memref<16x128xbf16, #tpu.memory_space<vmem>>, vector<16x128xbf16>
    %c0_4 = arith.constant 0 : index
    %c0_5 = arith.constant 0 : index
    %5 = vector.load %arg4[%c0_4, %c0_5] : memref<128x128xbf16, #tpu.memory_space<vmem>>, vector<128x128xbf16>
    %cst = arith.constant dense<0.000000e+00> : vector<16x128xf32>
    %6 = tpu.matmul %4, %5, %cst {dimension_numbers = #tpu.dot_dimension_numbers<[1], [0], [0], [1], [0, 0, 1, 1], [], []>} : vector<16x128xbf16>, vector<128x128xbf16>, vector<16x128xf32> -> vector<16x128xf32>
    %7 = arith.addf %3, %6 : vector<16x128xf32>
    %c0_6 = arith.constant 0 : index
    %c0_7 = arith.constant 0 : index
    %8 = vector.load %arg6[%c0_6, %c0_7] : memref<16x128xf32, #tpu.memory_space<vmem>>, vector<16x128xf32>
    tpu.vector_store %arg6[%c0_6, %c0_7], %7 {strides = array<i32>} : memref<16x128xf32, #tpu.memory_space<vmem>>, vector<16x128xf32>,
    return
  }
  func.func @transform_0(%arg0: i32, %arg1: i32, %arg2: i32) -> (i32, i32) {
    %c0_i32 = arith.constant 0 : i32
    return %arg0, %arg2 : i32, i32
  }
  func.func @transform_1(%arg0: i32, %arg1: i32, %arg2: i32) -> (i32, i32) {
    %c0_i32 = arith.constant 0 : i32
    return %arg2, %arg1 : i32, i32
  }
  func.func @transform_2(%arg0: i32, %arg1: i32, %arg2: i32) -> (i32, i32) {
    %c0_i32 = arith.constant 0 : i32
    %c0_i32_0 = arith.constant 0 : i32
    return %c0_i32, %arg1 : i32, i32
  }
  func.func @transform_3(%arg0: i32, %arg1: i32, %arg2: i32) -> (i32, i32) {
    %c0_i32 = arith.constant 0 : i32
    return %arg0, %arg1 : i32, i32
  }
}

</mosaic_0001>

<llo_original>
// kernel: linreg_forward.1
$region0: #{linreg_forward.1}
  #allocation0 [shape = 'u32[]', space=smem, size = 0x4, offset = 0x4, fixed_abs, tag = 'smem constant byte address 0x4 - core index']
  #allocation1 [shape = 'u32[144,128]{1,0:T(1,128)}', space=vmem, size = 0x12000, scoped, tag = 'internal scratch']
  %s0 = inlined_call_operand.vmem [shape: bf16[16,128], index: 0, kind: input, shape index: {}]
  %s1 = inlined_call_operand.hbm [shape: bf16[128,128], index: 1, kind: input, shape index: {}]
  %s2 = inlined_call_operand.vmem [shape: f32[1,128], index: 2, kind: input, shape index: {}]
  %s3 = inlined_call_operand.vmem [shape: f32[16,128], index: 3, kind: output, shape index: {}]
  %s4 = sld [smem:[#allocation0]]
  $region30: #{linreg_forward.1} parent=0
    _
  %s6 = ssub.s32 1, %s4
  %s7 = scalar_select 0, %s6, %s4
  $region1: #{linreg_forward.1} parent=0
    #allocation2 [shape = 'u8[32768]{0}', space=vmem, size = 0x8000, scoped, tag = 'input window, operand 1, single buffered']
    #allocation3 [shape = 's32[1]{0}', space=sflag, size = 0x4, scoped, tag = 'scoped memory for linreg_forward.1']
    %8 = vsyncpa [#allocation3], 0
    // Predicated region
    $region2: #{linreg_forward.1} parent=1 // pred_check
      _
    $region3: #{linreg_forward.1} parent=1 // pred_check_branch
      %10 = sbr.rel (0) target = $region5
    $region4: #{linreg_forward.1} parent=1 // pred_region
      _
    $region5: #{linreg_forward.1} parent=1 // pred_fallthru
      _
    // Predicated region
    $region6: #{linreg_forward.1} parent=1 // pred_check
      _
    $region7: #{linreg_forward.1} parent=1 // pred_check_branch
      %12 = sbr.rel (0) target = $region9
    $region8: #{linreg_forward.1} parent=1 // pred_region
      %s14 = ssub.s32 1024, 1024
      %15 = vsyncadd [#allocation3], %s14
      %s16 = sshll.u32 [#allocation2], 4
      %s17 = int_to_ptr.vmem [resolvable:$true] %s16
      %22 = dma.hbm_to_vmem [thread:$0]  %s1, 1024, %s17, [#allocation3], 64, 64, 4
    $region9: #{linreg_forward.1} parent=1 // pred_fallthru
      _
    // Predicated region
    $region10: #{linreg_forward.1} parent=1 // pred_check
      _
    $region11: #{linreg_forward.1} parent=1 // pred_check_branch
      %24 = sbr.rel (0) target = $region13
    $region12: #{linreg_forward.1} parent=1 // pred_region
      _
    $region13: #{linreg_forward.1} parent=1 // pred_fallthru
      _
    // Predicated region
    $region14: #{linreg_forward.1} parent=1 // pred_check
      _
    $region15: #{linreg_forward.1} parent=1 // pred_check_branch
      %26 = sbr.rel (0) target = $region17
    $region16: #{linreg_forward.1} parent=1 // pred_region
      %27 = dma.done [#allocation3], 1024
    $region17: #{linreg_forward.1} parent=1 // pred_fallthru
      _
    %p29 = scmp.eq.s32.totalorder 0, 0
    // Predicated region
    $region18: #{linreg_forward.1} parent=1 // pred_check
      %p30 = pneg %p29
    $region19: #{linreg_forward.1} parent=1 // pred_check_branch
      %32 = sbr.rel (%p30) target = $region21
    $region20: #{linreg_forward.1} parent=1 // pred_region
      %v33 = vld [vmem:[%s2] sm:$0x1]
      %v35 = vlaneseq
      %v36 = vshrl.u32 %v35, 7
      %v37 = vsub.s32 0, %v36
      %v38 = vrot.slane %v33, %v37
      %40 = vst [vmem:[%s3] sm:$0xff] %v38
      %41 = vst [vmem:[%s3 + $0x8] sm:$0xff] %v38
    $region21: #{linreg_forward.1} parent=1 // pred_fallthru
      _
    %v42 = vld [vmem:[%s3] sm:$0xff]
    %v43 = vld [vmem:[%s3 + $0x8] sm:$0xff]
    %v44 = vld [vmem:[%s0] sm:$0xf]
    %v45 = vld [vmem:[%s0 + $0x4] sm:$0xf]
    %v46 = vld [vmem:[#allocation2] sm:$0xf]
    %v47 = vld [vmem:[#allocation2 + $0x4] sm:$0xf]
    %v48 = vld [vmem:[#allocation2 + $0x8] sm:$0xf]
    %v49 = vld [vmem:[#allocation2 + $0xc] sm:$0xf]
    %v50 = vld [vmem:[#allocation2 + $0x10] sm:$0xf]
    %v51 = vld [vmem:[#allocation2 + $0x14] sm:$0xf]
    %v52 = vld [vmem:[#allocation2 + $0x18] sm:$0xf]
    %v53 = vld [vmem:[#allocation2 + $0x1c] sm:$0xf]
    %v54 = vld [vmem:[#allocation2 + $0x20] sm:$0xf]
    %v55 = vld [vmem:[#allocation2 + $0x24] sm:$0xf]
    %v56 = vld [vmem:[#allocation2 + $0x28] sm:$0xf]
    %v57 = vld [vmem:[#allocation2 + $0x2c] sm:$0xf]
    %v58 = vld [vmem:[#allocation2 + $0x30] sm:$0xf]
    %v59 = vld [vmem:[#allocation2 + $0x34] sm:$0xf]
    %v60 = vld [vmem:[#allocation2 + $0x38] sm:$0xf]
    %v61 = vld [vmem:[#allocation2 + $0x3c] sm:$0xf]
    %v64 = vunpack.c.l.b16 %v44
    %v65 = vunpack.c.l.b16 %v45
    %v66 = vpack.c.b16 %v65, %v64
    %v84 = vunpack.c.l.b16 %v46
    %v85 = vunpack.c.l.b16 %v47
    %v86 = vunpack.c.l.b16 %v48
    %v87 = vunpack.c.l.b16 %v49
    %v88 = vunpack.c.l.b16 %v50
    %v89 = vunpack.c.l.b16 %v51
    %v90 = vunpack.c.l.b16 %v52
    %v91 = vunpack.c.l.b16 %v53
    %v92 = vunpack.c.l.b16 %v54
    %v93 = vunpack.c.l.b16 %v55
    %v94 = vunpack.c.l.b16 %v56
    %v95 = vunpack.c.l.b16 %v57
    %v96 = vunpack.c.l.b16 %v58
    %v97 = vunpack.c.l.b16 %v59
    %v98 = vunpack.c.l.b16 %v60
    %v99 = vunpack.c.l.b16 %v61
    %v100 = vpack.c.b16 %v85, %v84
    %v101 = vpack.c.b16 %v87, %v86
    %v102 = vpack.c.b16 %v89, %v88
    %v103 = vpack.c.b16 %v91, %v90
    %v104 = vpack.c.b16 %v93, %v92
    %v105 = vpack.c.b16 %v95, %v94
    %v106 = vpack.c.b16 %v97, %v96
    %v107 = vpack.c.b16 %v99, %v98
    %116 = vmatprep.subr.bf16.mxu0 0
    %117 = vmatpush1.bf16.msra.mxu0 %v107
    %118 = vmatprep.subr.bf16.mxu0 0
    %119 = vmatpush1.bf16.msra.mxu0 %v106
    %120 = vmatprep.subr.bf16.mxu0 0
    %121 = vmatpush1.bf16.msra.mxu0 %v105
    %122 = vmatprep.subr.bf16.mxu0 0
    %123 = vmatpush1.bf16.msra.mxu0 %v104
    %124 = vmatprep.subr.bf16.mxu0 0
    %125 = vmatpush1.bf16.msra.mxu0 %v103
    %126 = vmatprep.subr.bf16.mxu0 0
    %127 = vmatpush1.bf16.msra.mxu0 %v102
    %128 = vmatprep.subr.bf16.mxu0 0
    %129 = vmatpush1.bf16.msra.mxu0 %v101
    %130 = vmatprep.subr.bf16.mxu0 0
    %131 = vmatpush1.bf16.msra.mxu0 %v100
    %132 = vmatprep.subr.bf16.mxu0 0
    %133 = vmatpush2.bf16.msra.mxu0 0
    %134 = vmatprep.subr.bf16.mxu0 0
    %135 = vmatpush2.bf16.msra.mxu0 0
    %136 = vmatprep.subr.bf16.mxu0 0
    %137 = vmatpush2.bf16.msra.mxu0 0
    %138 = vmatprep.subr.bf16.mxu0 0
    %139 = vmatpush2.bf16.msra.mxu0 0
    %140 = vmatprep.subr.bf16.mxu0 0
    %141 = vmatpush2.bf16.msra.mxu0 0
    %142 = vmatprep.subr.bf16.mxu0 0
    %143 = vmatpush2.bf16.msra.mxu0 0
    %144 = vmatprep.subr.bf16.mxu0 0
    %145 = vmatpush2.bf16.msra.mxu0 0
    %146 = vmatprep.subr.bf16.mxu0 0
    %147 = vmatpush2.bf16.msra.mxu0 0
    %148 = vmatprep.mubr.bf16.mxu0 0
    %149 = vmatmul.mubr.bf16.gmra.mxu0 %v66
    %v150 = vpop.f32.mrf.mxu0
    %v151 = vadd.f32 0.0, %v150
    %v152 = vpop.f32.mrf.mxu0
    %v153 = vpop.f32.mrf.mxu0
    %v154 = vadd.f32 0.0, %v153
    %v155 = vpop.f32.mrf.mxu0
    %156 = vdwg.mxu0
    %v157 = vadd.f32 %v42, %v151
    %v158 = vadd.f32 %v43, %v154
    %159 = vst [vmem:[%s3] sm:$0xff] %v157
    %160 = vst [vmem:[%s3 + $0x8] sm:$0xff] %v158
    // Predicated region
    $region22: #{linreg_forward.1} parent=1 // pred_check
      _
    $region23: #{linreg_forward.1} parent=1 // pred_check_branch
      %162 = sbr.rel (0) target = $region25
    $region24: #{linreg_forward.1} parent=1 // pred_region
      _
    $region25: #{linreg_forward.1} parent=1 // pred_fallthru
      _
    // Predicated region
    $region26: #{linreg_forward.1} parent=1 // pred_check
      _
    $region27: #{linreg_forward.1} parent=1 // pred_check_branch
      %164 = sbr.rel (0) target = $region29
    $region28: #{linreg_forward.1} parent=1 // pred_region
      _
    $region29: #{linreg_forward.1} parent=1 // pred_fallthru
      _
    %165 = vsyncpa [#allocation3], 1

</llo_original>
